<compile_context>
chip_gen: v7x
topology: tpu7x:2x2x1
jax: 0.10.0
libtpu: 0.0.40
codegen_flags: <defaults>
</compile_context>

<pallas_src>
import jax
import jax.numpy as jnp
from jax.experimental import pallas as pl
from jax.experimental.pallas import tpu as pltpu

LOG_STD_MIN = -5.0
LOG_STD_MAX = 2.0


def _act_converter_kernel(feat_ref, w_ref, aux_ref, mean_ref, std_ref):
    # Fused heads, NT matmul (batch on lanes):
    #   z[j, i] = sum_k W_t[j, k] * feature[i, k]          (2A, tm)
    z = jax.lax.dot_general(
        w_ref[...], feat_ref[...],
        dimension_numbers=(((1,), (1,)), ((), ())),
        preferred_element_type=jnp.float32,
    )
    # aux columns: 0 = bias [b_mu; b_ls], 1 = loc [loc; 0], 2 = scale [scale; scale]
    z = z + aux_ref[:, 0:1]

    a = mean_ref.shape[0]
    mu = z[:a, :]
    log_std = z[a:, :]

    # rows 0..A-1: tanh-squashed mean, rescaled to the Box action range
    mean_ref[...] = jnp.tanh(mu) * aux_ref[:a, 2:3] + aux_ref[:a, 1:2]
    # rows A..2A-1: clamped log_std -> std, scaled into action units
    std_ref[...] = (
        jnp.exp(jnp.clip(log_std, LOG_STD_MIN, LOG_STD_MAX)) * aux_ref[a:, 2:3]
    )


def pack_action_converter_params(w_mu, w_ls, b_mu, b_ls, loc, scale,
                                 matmul_dtype=jnp.float32):
    """Pack per-head params once (hoist out of the per-call path).

    w_mu, w_ls: (D, A);  b_mu, b_ls, loc, scale: (1, A)
    Returns:
      w_t : (2A, D) in `matmul_dtype` (fused [w_mu; w_ls] transposed for NT matmul)
      aux : (2A, 3) f32, columns = [bias | loc-or-0 | scale]
    """
    w_t = jnp.concatenate([w_mu.T, w_ls.T], axis=0).astype(matmul_dtype)   # (2A, D)
    bias_col = jnp.concatenate([b_mu.T, b_ls.T], axis=0)                   # (2A, 1)
    loc_col = jnp.concatenate([loc.T, jnp.zeros_like(loc).T], axis=0)      # (2A, 1)
    scale_col = jnp.concatenate([scale.T, scale.T], axis=0)                # (2A, 1)
    aux = jnp.concatenate([bias_col, loc_col, scale_col], axis=1)          # (2A, 3)
    return w_t, aux.astype(jnp.float32)


def _pick_tm(B, D, A, in_bytes, vmem_budget_bytes=24 << 20, tm_cap=2048):
    """Largest lane-dense batch tile (multiple of 128) that fits the VMEM budget.

    Budget kept conservative so it is valid under v7x's 64 MiB physical /
    32 MiB default scoped VMEM as well as v5e/v6e.
    """
    if B <= 128:
        return B  # single block; lane dim equals the full batch
    tm = min(tm_cap, (min(B, tm_cap) // 128) * 128)

    def vmem_bytes(t):
        feat = 2 * t * D * in_bytes            # double-buffered feature tile
        outs = 2 * 2 * (A * t * 4)             # mean+std (f32), double-buffered
        params = 2 * A * D * in_bytes + 2 * A * 3 * 4   # resident W_t + aux
        return feat + outs + params

    while tm > 128 and vmem_bytes(tm) > vmem_budget_bytes:
        tm -= 128
    return tm


def action_output_converter(feature, w_t, aux, *, tm=None):
    """feature: (B, D) -> (mean, mode, std), each (B, A) f32.

    `w_t`/`aux` come from pack_action_converter_params (pack once, reuse).
    If w_t is bf16 the feature is cast to bf16 at the call boundary; the MXU
    accumulation and the epilogue stay f32.
    """
    B, D = feature.shape
    two_a, d_w = w_t.shape
    assert d_w == D
    A = two_a // 2

    feature = feature.astype(w_t.dtype)
    in_bytes = jnp.dtype(w_t.dtype).itemsize
    if tm is None:
        tm = _pick_tm(B, D, A, in_bytes)
    tm = min(tm, B)
    grid = (pl.cdiv(B, tm),)

    mean_t, std_t = pl.pallas_call(
        _act_converter_kernel,
        out_shape=(
            jax.ShapeDtypeStruct((A, B), jnp.float32),
            jax.ShapeDtypeStruct((A, B), jnp.float32),
        ),
        grid_spec=pltpu.PrefetchScalarGridSpec(
            num_scalar_prefetch=0,
            grid=grid,
            in_specs=[
                pl.BlockSpec((tm, D), lambda i: (i, 0)),        # feature tile
                pl.BlockSpec((two_a, D), lambda i: (0, 0)),     # fused weights, resident
                pl.BlockSpec((two_a, 3), lambda i: (0, 0)),     # packed bias/loc/scale
            ],
            out_specs=[
                pl.BlockSpec((A, tm), lambda i: (0, i)),        # mean_t, lane-dense
                pl.BlockSpec((A, tm), lambda i: (0, i)),        # std_t,  lane-dense
            ],
        ),
        # "parallel" lets megacore / dual-TC parts shard the batch grid for
        # large eval batches; at B<=128 it is a single grid step anyway.
        compiler_params=pltpu.CompilerParams(
            dimension_semantics=("parallel",)),
    )(feature, w_t, aux)

    mean = mean_t.T   # (B, A)
    std = std_t.T     # (B, A)
    # TanhNormal mode == squashed mu == the deterministic head; returned as both.
    return mean, mean, std


if __name__ == "__main__":
    # Small shapes consistent with the module: hidden=32, action_dim=4, batch=8.
    B, D, A = 8, 32, 4

    key = jax.random.PRNGKey(0)
    k_feat, k_wmu, k_wls = jax.random.split(key, 3)

    feature = jax.random.normal(k_feat, (B, D), dtype=jnp.float32)

    # Deterministic parameter init (synthetic; no checkpoint load).
    w_mu = jax.random.normal(k_wmu, (D, A), dtype=jnp.float32) * 0.05
    w_ls = jax.random.normal(k_wls, (D, A), dtype=jnp.float32) * 0.05
    b_mu = jnp.zeros((1, A), dtype=jnp.float32)
    b_ls = jnp.full((1, A), -1.0, dtype=jnp.float32)

    # gym.spaces.Box(low=-1, high=1, shape=(A,)) -> loc=0, scale=1 per action dim.
    low = jnp.full((1, A), -1.0, dtype=jnp.float32)
    high = jnp.full((1, A), 1.0, dtype=jnp.float32)
    loc = (high + low) / 2.0
    scale = (high - low) / 2.0

    # Pack once (hoisted out of the per-call path), f32 MXU path.
    w_t, aux = pack_action_converter_params(w_mu, w_ls, b_mu, b_ls, loc, scale)
    mean, mode, std = action_output_converter(feature, w_t, aux)
    jax.block_until_ready((mean, mode, std))

    # Reference check in plain JAX.
    mu_ref = feature @ w_mu + b_mu
    ls_ref = jnp.clip(feature @ w_ls + b_ls, LOG_STD_MIN, LOG_STD_MAX)
    mean_ref = jnp.tanh(mu_ref) * scale + loc
    std_ref = jnp.exp(ls_ref) * scale
    assert jnp.allclose(mean, mean_ref, atol=1e-5)
    assert jnp.allclose(mode, mean_ref, atol=1e-5)
    assert jnp.allclose(std, std_ref, atol=1e-5)

    # bf16 MXU path: halves feature/weight DMA bytes, native bf16 MXU passes;
    # accumulation and the epilogue remain f32.
    w_t16, aux16 = pack_action_converter_params(
        w_mu, w_ls, b_mu, b_ls, loc, scale, matmul_dtype=jnp.bfloat16)
    mean16, _, std16 = action_output_converter(feature, w_t16, aux16)
    jax.block_until_ready((mean16, std16))
    assert jnp.allclose(mean16, mean_ref, atol=5e-2)
    assert jnp.allclose(std16, std_ref, atol=5e-2)

    # TODO(synk): sample()/rsample()/log_prob()/entropy() of the distribution
    # object are stateful/stochastic API surface, not a forward tensor op; only
    # the deterministic tensors (mean/mode/std) are produced by the kernel.
    # TODO(synk): `mean` here is the TanhNormal mode / deterministic action, not
    # the analytic E[tanh(X)], and `std` is the pre-squash std in action units.
    print("KERNEL_OK")
</pallas_src>

<mosaic_0001>
module attributes {stable_mosaic.version = 11 : i64} {
  func.func @_act_converter_kernel(%arg0: i32, %arg1: memref<8x32xf32, #tpu.memory_space<vmem>>, %arg2: memref<8x32xf32, #tpu.memory_space<vmem>>, %arg3: memref<8x3xf32, #tpu.memory_space<vmem>>, %arg4: memref<4x8xf32, #tpu.memory_space<vmem>>, %arg5: memref<4x8xf32, #tpu.memory_space<vmem>>) attributes {dimension_semantics = [#tpu.dimension_semantics<parallel>], iteration_bounds = array<i64: 1>, scalar_prefetch = 0 : i64, scratch_operands = 0 : i64, tpu.core_type = #tpu.core_type<tc>, window_params = [{transform_indices = @transform_0, window_bounds = array<i64: 8, 32>}, {pipeline_mode = #tpu.pipeline_mode<synchronous>, transform_indices = @transform_1, window_bounds = array<i64: 8, 32>}, {pipeline_mode = #tpu.pipeline_mode<synchronous>, transform_indices = @transform_2, window_bounds = array<i64: 8, 3>}, {transform_indices = @transform_3, window_bounds = array<i64: 4, 8>}, {transform_indices = @transform_4, window_bounds = array<i64: 4, 8>}]} {
    %c0 = arith.constant 0 : index
    %c0_0 = arith.constant 0 : index
    %0 = vector.load %arg2[%c0, %c0_0] : memref<8x32xf32, #tpu.memory_space<vmem>>, vector<8x32xf32>
    %c0_1 = arith.constant 0 : index
    %c0_2 = arith.constant 0 : index
    %1 = vector.load %arg1[%c0_1, %c0_2] : memref<8x32xf32, #tpu.memory_space<vmem>>, vector<8x32xf32>
    %cst = arith.constant dense<0.000000e+00> : vector<8x8xf32>
    %2 = tpu.matmul %0, %1, %cst {dimension_numbers = #tpu.dot_dimension_numbers<[1], [1], [0], [0], [0, 0, 1, 0], [], []>} : vector<8x32xf32>, vector<8x32xf32>, vector<8x8xf32> -> vector<8x8xf32>
    %c0_3 = arith.constant 0 : index
    %c0_4 = arith.constant 0 : index
    %3 = vector.load %arg3[%c0_3, %c0_4] : memref<8x3xf32, #tpu.memory_space<vmem>>, vector<8x1xf32>
    %4 = vector.broadcast %3 : vector<8x1xf32> to vector<8x8xf32>
    %5 = arith.addf %2, %4 : vector<8x8xf32>
    %6 = vector.extract_strided_slice %5 {offsets = [0, 0], sizes = [4, 8], strides = [1, 1]} : vector<8x8xf32> to vector<4x8xf32>
    %7 = vector.extract_strided_slice %5 {offsets = [4, 0], sizes = [4, 8], strides = [1, 1]} : vector<8x8xf32> to vector<4x8xf32>
    %8 = math.tanh %6 : vector<4x8xf32>
    %c0_5 = arith.constant 0 : index
    %c2 = arith.constant 2 : index
    %9 = vector.load %arg3[%c0_5, %c2] : memref<8x3xf32, #tpu.memory_space<vmem>>, vector<4x1xf32>
    %10 = vector.broadcast %9 : vector<4x1xf32> to vector<4x8xf32>
    %11 = arith.mulf %8, %10 : vector<4x8xf32>
    %c0_6 = arith.constant 0 : index
    %c1 = arith.constant 1 : index
    %12 = vector.load %arg3[%c0_6, %c1] : memref<8x3xf32, #tpu.memory_space<vmem>>, vector<4x1xf32>
    %13 = vector.broadcast %12 : vector<4x1xf32> to vector<4x8xf32>
    %14 = arith.addf %11, %13 : vector<4x8xf32>
    %c0_7 = arith.constant 0 : index
    %c0_8 = arith.constant 0 : index
    %15 = vector.load %arg4[%c0_7, %c0_8] : memref<4x8xf32, #tpu.memory_space<vmem>>, vector<4x8xf32>
    tpu.vector_store %arg4[%c0_7, %c0_8], %14 {strides = array<i32>} : memref<4x8xf32, #tpu.memory_space<vmem>>, vector<4x8xf32>,
    %cst_9 = arith.constant -5.000000e+00 : f32
    %cst_10 = arith.constant 2.000000e+00 : f32
    %16 = vector.broadcast %cst_9 : f32 to vector<4x8xf32>
    %17 = arith.maximumf %16, %7 : vector<4x8xf32>
    %18 = vector.broadcast %cst_10 : f32 to vector<4x8xf32>
    %19 = arith.minimumf %18, %17 : vector<4x8xf32>
    %20 = math.exp %19 : vector<4x8xf32>
    %c4 = arith.constant 4 : index
    %c2_11 = arith.constant 2 : index
    %21 = vector.load %arg3[%c4, %c2_11] : memref<8x3xf32, #tpu.memory_space<vmem>>, vector<4x1xf32>
    %22 = vector.broadcast %21 : vector<4x1xf32> to vector<4x8xf32>
    %23 = arith.mulf %20, %22 : vector<4x8xf32>
    %c0_12 = arith.constant 0 : index
    %c0_13 = arith.constant 0 : index
    %24 = vector.load %arg5[%c0_12, %c0_13] : memref<4x8xf32, #tpu.memory_space<vmem>>, vector<4x8xf32>
    tpu.vector_store %arg5[%c0_12, %c0_13], %23 {strides = array<i32>} : memref<4x8xf32, #tpu.memory_space<vmem>>, vector<4x8xf32>,
    return
  }
  func.func @transform_0(%arg0: i32) -> (i32, i32) {
    %c0_i32 = arith.constant 0 : i32
    %c0_i32_0 = arith.constant 0 : i32
    return %arg0, %c0_i32 : i32, i32
  }
  func.func @transform_1(%arg0: i32) -> (i32, i32) {
    %c0_i32 = arith.constant 0 : i32
    %c0_i32_0 = arith.constant 0 : i32
    %c0_i32_1 = arith.constant 0 : i32
    return %c0_i32, %c0_i32_0 : i32, i32
  }
  func.func @transform_2(%arg0: i32) -> (i32, i32) {
    %c0_i32 = arith.constant 0 : i32
    %c0_i32_0 = arith.constant 0 : i32
    %c0_i32_1 = arith.constant 0 : i32
    return %c0_i32, %c0_i32_0 : i32, i32
  }
  func.func @transform_3(%arg0: i32) -> (i32, i32) {
    %c0_i32 = arith.constant 0 : i32
    %c0_i32_0 = arith.constant 0 : i32
    return %c0_i32, %arg0 : i32, i32
  }
  func.func @transform_4(%arg0: i32) -> (i32, i32) {
    %c0_i32 = arith.constant 0 : i32
    %c0_i32_0 = arith.constant 0 : i32
    return %c0_i32, %arg0 : i32, i32
  }
}

</mosaic_0001>

<llo_original>
// kernel: tpu_custom_call.1
$region0: #{tpu_custom_call.1}
  #allocation0 [shape = 'u32[]', space=smem, size = 0x4, offset = 0x4, fixed_abs, tag = 'smem constant byte address 0x4 - core index']
  #allocation1 [shape = 'u32[144,128]{1,0:T(1,128)}', space=vmem, size = 0x12000, scoped, tag = 'internal scratch']
  %s0 = inlined_call_operand.vmem [shape: f32[8,32], index: 0, kind: input, shape index: {}]
  %s1 = inlined_call_operand.hbm [shape: f32[8,32], index: 1, kind: input, shape index: {}]
  %s2 = inlined_call_operand.vmem [shape: f32[8,3], index: 2, kind: input, shape index: {}]
  %s3 = inlined_call_operand.hbm [shape: f32[4,8], index: 3, kind: output, shape index: {0}]
  %s4 = inlined_call_operand.hbm [shape: f32[4,8], index: 4, kind: output, shape index: {1}]
  %5 = xla_tuple %s3, %s4
  %s6 = sld [smem:[#allocation0]]
  $region34: #{tpu_custom_call.1} parent=0
    _
  %s8 = ssub.s32 1, %s6
  %s9 = scalar_select 0, %s8, %s6
  $region1: #{tpu_custom_call.1} parent=0
    #allocation2 [shape = 'u8[4096]{0}', space=vmem, size = 0x1000, scoped, tag = 'input window, operand 1, single buffered']
    #allocation3 [shape = 's32[1]{0}', space=sflag, size = 0x4, scoped, tag = 'scoped memory for tpu_custom_call.1']
    #allocation4 [shape = 's32[1]{0}', space=sflag, size = 0x4, scoped, tag = 'scoped memory for tpu_custom_call.1']
    #allocation5 [shape = 'u8[2048]{0}', space=vmem, size = 0x800, scoped, tag = 'output window, operand 0, single buffered']
    #allocation6 [shape = 'u8[2048]{0}', space=vmem, size = 0x800, scoped, tag = 'output window, operand 1, single buffered']
    #allocation7 [shape = 's32[1]{0}', space=sflag, size = 0x4, scoped, tag = 'scoped memory for tpu_custom_call.1']
    %10 = vsyncpa [#allocation3], 0
    %11 = vsyncpa [#allocation4], 0
    %12 = vsyncpa [#allocation7], 0
    // Predicated region
    $region2: #{tpu_custom_call.1} parent=1 // pred_check
      _
    $region3: #{tpu_custom_call.1} parent=1 // pred_check_branch
      %14 = sbr.rel (0) target = $region5
    $region4: #{tpu_custom_call.1} parent=1 // pred_region
      _
    $region5: #{tpu_custom_call.1} parent=1 // pred_fallthru
      _
    // Predicated region
    $region6: #{tpu_custom_call.1} parent=1 // pred_check
      _
    $region7: #{tpu_custom_call.1} parent=1 // pred_check_branch
      %16 = sbr.rel (0) target = $region9
    $region8: #{tpu_custom_call.1} parent=1 // pred_region
      %s18 = ssub.s32 128, 128
      %19 = vsyncadd [#allocation3], %s18
      %s21 = sshll.u32 [#allocation2], 4
      %s22 = int_to_ptr.vmem [resolvable:$true] %s21
      %24 = dma.hbm_to_vmem [thread:$0]  %s1, 128, %s22, [#allocation3]
    $region9: #{tpu_custom_call.1} parent=1 // pred_fallthru
      _
    // Predicated region
    $region10: #{tpu_custom_call.1} parent=1 // pred_check
      _
    $region11: #{tpu_custom_call.1} parent=1 // pred_check_branch
      %26 = sbr.rel (0) target = $region13
    $region12: #{tpu_custom_call.1} parent=1 // pred_region
      _
    $region13: #{tpu_custom_call.1} parent=1 // pred_fallthru
      _
    // Predicated region
    $region14: #{tpu_custom_call.1} parent=1 // pred_check
      _
    $region15: #{tpu_custom_call.1} parent=1 // pred_check_branch
      %28 = sbr.rel (0) target = $region17
    $region16: #{tpu_custom_call.1} parent=1 // pred_region
      %29 = dma.done [#allocation3], 128
    $region17: #{tpu_custom_call.1} parent=1 // pred_fallthru
      _
    %v30 = vld [vmem:[#allocation2] sm:$0xff]
    %v31 = vld [vmem:[%s0] sm:$0xff]
    %v32 = vld [vmem:[%s2] sm:$0xff]
    %34 = vset.pattern.permute.xlu0 0
    %35 = vperm.xlu0 %34, %v32
    %v36 = vpop.permute.xlu0 %35
    %vm38 = vcmask 261120
    %v40 = vsel %vm38, %v30, 0
    %v43 = vsel %vm38, %v31, 0
    %45 = vmatprep.subr.mxu0 0.0
    %46 = vmatpush1.xpose.msra.mxu0 %v43
    %47 = vmatprep.subr.mxu0 0.0
    %48 = vmatpush1.xpose.msra.mxu0 0.0
    %49 = vmatprep.subr.mxu0 0.0
    %50 = vmatpush1.xpose.msra.mxu0 0.0
    %51 = vmatprep.subr.mxu0 0.0
    %52 = vmatpush1.xpose.msra.mxu0 0.0
    %53 = vmatprep.subr.mxu0 0.0
    %54 = vmatpush1.xpose.msra.mxu0 0.0
    %55 = vmatprep.subr.mxu0 0.0
    %56 = vmatpush1.xpose.msra.mxu0 0.0
    %57 = vmatprep.subr.mxu0 0.0
    %58 = vmatpush1.xpose.msra.mxu0 0.0
    %59 = vmatprep.subr.mxu0 0.0
    %60 = vmatpush1.xpose.msra.mxu0 0.0
    %61 = vmatprep.subr.mxu0 0.0
    %62 = vmatpush1.xpose.msra.mxu0 0.0
    %63 = vmatprep.subr.mxu0 0.0
    %64 = vmatpush1.xpose.msra.mxu0 0.0
    %65 = vmatprep.subr.mxu0 0.0
    %66 = vmatpush1.xpose.msra.mxu0 0.0
    %67 = vmatprep.subr.mxu0 0.0
    %68 = vmatpush1.xpose.msra.mxu0 0.0
    %69 = vmatprep.subr.mxu0 0.0
    %70 = vmatpush1.xpose.msra.mxu0 0.0
    %71 = vmatprep.subr.mxu0 0.0
    %72 = vmatpush1.xpose.msra.mxu0 0.0
    %73 = vmatprep.subr.mxu0 0.0
    %74 = vmatpush1.xpose.msra.mxu0 0.0
    %75 = vmatprep.subr.mxu0 0.0
    %76 = vmatpush1.xpose.msra.mxu0 0.0
    %77 = vmatprep.subr.mxu0 0.0
    %78 = vmatpush1.xpose.msra.mxu0 0.0
    %79 = vmatprep.subr.mxu0 0.0
    %80 = vmatpush1.xpose.msra.mxu0 0.0
    %81 = vmatprep.subr.mxu0 0.0
    %82 = vmatpush1.xpose.msra.mxu0 0.0
    %83 = vmatprep.subr.mxu0 0.0
    %84 = vmatpush1.xpose.msra.mxu0 0.0
    %85 = vmatprep.subr.mxu0 0.0
    %86 = vmatpush1.xpose.msra.mxu0 0.0
    %87 = vmatprep.subr.mxu0 0.0
    %88 = vmatpush1.xpose.msra.mxu0 0.0
    %89 = vmatprep.subr.mxu0 0.0
    %90 = vmatpush1.xpose.msra.mxu0 0.0
    %91 = vmatprep.subr.mxu0 0.0
    %92 = vmatpush1.xpose.msra.mxu0 0.0
    %93 = vmatprep.subr.mxu0 0.0
    %94 = vmatpush1.xpose.msra.mxu0 0.0
    %95 = vmatprep.subr.mxu0 0.0
    %96 = vmatpush1.xpose.msra.mxu0 0.0
    %97 = vmatprep.subr.mxu0 0.0
    %98 = vmatpush1.xpose.msra.mxu0 0.0
    %99 = vmatprep.subr.mxu0 0.0
    %100 = vmatpush1.xpose.msra.mxu0 0.0
    %101 = vmatprep.subr.mxu0 0.0
    %102 = vmatpush1.xpose.msra.mxu0 0.0
    %103 = vmatprep.subr.mxu0 0.0
    %104 = vmatpush1.xpose.msra.mxu0 0.0
    %105 = vmatprep.subr.mxu0 0.0
    %106 = vmatpush1.xpose.msra.mxu0 0.0
    %107 = vmatprep.subr.mxu0 0.0
    %108 = vmatpush1.xpose.msra.mxu0 0.0
    %109 = vmatprep.mubr.f32.mxu0 0.0
    %110 = vmatmul.mubr.f32.gmra.mrb[0].mxu0 %v40
    %v111 = vpop.f32.mrb[0].mxu0
    %v112 = vadd.f32 %v36, %v111
    %v113 = vpop.f32.mrb[0].mxu0
    %114 = vdwg.mxu0
    %v115 = vtanh.pop %v112
    %v116 = vld [vmem:[%s2] sm:$0xf]
    %118 = vset.pattern.permute.xlu0 2
    %119 = vperm.xlu0 %118, %v116
    %v120 = vpop.permute.xlu0 %119
    %v122 = vmul.f32 %v115, %v120
    %123 = vset.pattern.permute.xlu0 1
    %124 = vperm.xlu0 %123, %v116
    %v125 = vpop.permute.xlu0 %124
    %v127 = vadd.f32 %v122, %v125
    %vm128 = vcmask 60416
    %129 = vst.msk [vmem:[#allocation5] sm:$0xf] %vm128, %v127
    %v130 = vmax.f32 %v112, -5.0
    %v131 = vmin.f32 %v130, 2.0
    %v132 = vmul.f32 %v131, 1.442695
    %v133 = vpow.pop %v132
    %v134 = vld [vmem:[%s2 + $0x4] sm:$0xf]
    %136 = vset.pattern.permute.xlu0 2
    %137 = vperm.xlu0 %136, %v134
    %v138 = vpop.permute.xlu0 %137
    %v139 = vrot.slane %v138, 4
    %v141 = vmul.f32 %v133, %v139
    %vm142 = vcmask 64516
    %143 = vst.msk [vmem:[#allocation6 - $0x4] sm:$0xf0] %vm142, %v141
    // Predicated region
    $region18: #{tpu_custom_call.1} parent=1 // pred_check
      _
    $region19: #{tpu_custom_call.1} parent=1 // pred_check_branch
      %145 = sbr.rel (0) target = $region21
    $region20: #{tpu_custom_call.1} parent=1 // pred_region
      %s147 = ssub.s32 64, 64
      %148 = vsyncadd [#allocation4], %s147
      %s150 = sshll.u32 [#allocation5], 4
      %s151 = int_to_ptr.vmem [resolvable:$true] %s150
      %153 = dma.vmem_to_hbm [thread:$0]  %s151, 64, %s3, [#allocation4]
    $region21: #{tpu_custom_call.1} parent=1 // pred_fallthru
      _
    // Predicated region
    $region22: #{tpu_custom_call.1} parent=1 // pred_check
      _
    $region23: #{tpu_custom_call.1} parent=1 // pred_check_branch
      %155 = sbr.rel (0) target = $region25
    $region24: #{tpu_custom_call.1} parent=1 // pred_region
      %s157 = ssub.s32 64, 64
      %158 = vsyncadd [#allocation7], %s157
      %s160 = sshll.u32 [#allocation6], 4
      %s161 = int_to_ptr.vmem [resolvable:$true] %s160
      %163 = dma.vmem_to_hbm [thread:$0]  %s161, 64, %s4, [#allocation7]
    $region25: #{tpu_custom_call.1} parent=1 // pred_fallthru
      _
    // Predicated region
    $region26: #{tpu_custom_call.1} parent=1 // pred_check
      _
    $region27: #{tpu_custom_call.1} parent=1 // pred_check_branch
      %165 = sbr.rel (0) target = $region29
    $region28: #{tpu_custom_call.1} parent=1 // pred_region
      %166 = dma.done [#allocation4], 64
    $region29: #{tpu_custom_call.1} parent=1 // pred_fallthru
      _
    // Predicated region
    $region30: #{tpu_custom_call.1} parent=1 // pred_check
      _
    $region31: #{tpu_custom_call.1} parent=1 // pred_check_branch
      %168 = sbr.rel (0) target = $region33
    $region32: #{tpu_custom_call.1} parent=1 // pred_region
      %169 = dma.done [#allocation7], 64
    $region33: #{tpu_custom_call.1} parent=1 // pred_fallthru
      _
    %170 = vsyncpa [#allocation3], 1
    %171 = vsyncpa [#allocation4], 1
    %172 = vsyncpa [#allocation7], 1

</llo_original>
